<compile_context>
chip_gen: v6e
topology: v6e:2x2x1
jax: 0.10.0
libtpu: 0.0.40
codegen_flags: <defaults>
</compile_context>

<pallas_src>
import math

import jax
import jax.numpy as jnp
import numpy as np
from jax.experimental import pallas as pl
from jax.experimental.pallas import tpu as pltpu


def _round_up(a, m):
    return (a + m - 1) // m * m


def _cdiv(a, b):
    return (a + b - 1) // b


def _vmem_budget_bytes():
    """Generation-aware scoped-VMEM budget (v7x ~48 MiB, v5e/v6e ~96 MiB)."""
    try:
        cap = int(pltpu.get_tpu_info().vmem_capacity_bytes)
    except Exception:
        cap = 64 << 20
    cap = max(cap, 32 << 20)
    return min(cap * 3 // 4, 100 << 20)


def _prep(a, rows, cols, dtype):
    """Cast + zero-pad to (rows, cols); no copies when already aligned."""
    if a.dtype != dtype:
        a = a.astype(dtype)
    pr, pc = rows - a.shape[0], cols - a.shape[1]
    if pr or pc:
        a = jnp.pad(a, ((0, pr), (0, pc)))
    return a


def _pick_b_tiling(B):
    """tb multiple of 8; aim for 256 (512 for very large B); keep >= 2 B-tiles
    when B allows so the 'parallel' axis feeds both v7x TensorCores."""
    Bp8 = _round_up(B, 8)
    tb_cap = min(512 if B >= 2048 else 256, Bp8)
    nb = _cdiv(Bp8, tb_cap)
    if Bp8 > 16 and nb < 2:
        nb = 2
    tb = _round_up(_cdiv(Bp8, nb), 8)
    return tb, tb * nb


def _pick_n_tiling(N, tn_cap):
    """tn multiple of 128, <= tn_cap, with minimal padding of N."""
    Np128 = _round_up(N, 128)
    tn_cap = max(128, min(tn_cap, Np128))
    nt = _cdiv(Np128, tn_cap)
    tn = _round_up(_cdiv(Np128, nt), 128)
    return tn, tn * nt


# ---------------- kernels ----------------


def _sgs_accum_kernel(sgs_ref, xw_ref, y_ref, acc_ref):
    """Re-associated path: y[i] = sum_n sgs[i, n] @ (x @ W)[n]."""
    n = pl.program_id(1)
    prod = jnp.dot(sgs_ref[...], xw_ref[...], preferred_element_type=jnp.float32)

    @pl.when(n == 0)
    def _init():
        acc_ref[...] = prod

    @pl.when(n != 0)
    def _accum():
        acc_ref[...] += prod

    @pl.when(n == pl.num_programs(1) - 1)
    def _finalize():
        y_ref[...] = acc_ref[...].astype(y_ref.dtype)


def _sgs_accum_w_kernel(sgs_ref, x_ref, w_ref, y_ref, acc_ref):
    """Resident-W path: acc[i] = sum_n sgs[i, n] @ x[n];  y[i] = acc[i] @ W."""
    n = pl.program_id(1)
    prod = jnp.dot(sgs_ref[...], x_ref[...], preferred_element_type=jnp.float32)

    @pl.when(n == 0)
    def _init():
        acc_ref[...] = prod

    @pl.when(n != 0)
    def _accum():
        acc_ref[...] += prod

    @pl.when(n == pl.num_programs(1) - 1)
    def _finalize():
        # Finalize in f32 (runs once per B tile): keeps full precision of the
        # accumulated sums instead of casting them down before the 2nd matmul.
        y_ref[...] = jnp.dot(
            acc_ref[...], w_ref[...], preferred_element_type=jnp.float32
        ).astype(y_ref.dtype)


# ---------------- wrapper ----------------


def hgnn_sg_attn_multiplicative(x, sgs, w, *, use_bf16=True):
    """Forward of HGNN_sg_attn_multiplicative: y = (sgs @ x) @ W.

    x: (N, mdim), sgs: (B, N), w: (mdim, vdim)  ->  y: (B, vdim)

    use_bf16: run the streamed (sgs @ .) matmul on the MXU in bf16 with f32
    accumulation.  sgs is a {0,1} membership matrix, so its cast is exact.
    """
    B, N = sgs.shape
    Nx, M = x.shape
    Mw, V = w.shape
    assert N == Nx, (N, Nx)
    assert M == Mw, (M, Mw)

    out_dtype = x.dtype
    out_itemsize = jnp.dtype(out_dtype).itemsize
    compute_dtype = jnp.bfloat16 if use_bf16 else jnp.float32
    bytes_per = 2 if use_bf16 else 4

    Mp = _round_up(M, 128)
    Vp = _round_up(V, 128)
    budget = _vmem_budget_bytes()

    # Re-associate to y = sgs @ (x @ W) when it reduces the streamed bytes
    # (vdim <= mdim) or when a VMEM-resident W would not fit the budget.
    # TODO(synk): for very large W with vdim > mdim, tile the vdim axis with a
    # third grid dimension instead of falling back to re-association.
    w_resident_bytes = 2 * Mp * Vp * 4        # budgeted as if double-buffered
    reassociate = (V <= M) or (w_resident_bytes > budget // 2)

    tb, Bp = _pick_b_tiling(B)
    Fp = Vp if reassociate else Mp            # feature width of streamed operand

    # VMEM accounting: acc scratch + (resident W) + double-buffered output;
    # the remainder goes to the double-buffered sgs / streamed-operand blocks.
    fixed = tb * Fp * 4 + 2 * tb * Vp * out_itemsize
    if not reassociate:
        fixed += w_resident_bytes
    per_tn = 2 * (tb + Fp) * bytes_per
    tn_cap = max(128, (max(budget - fixed, 0) // per_tn) // 128 * 128)
    tn, Np = _pick_n_tiling(N, min(tn_cap, 2048))

    grid = (Bp // tb, Np // tn)
    sgs_p = _prep(sgs, Bp, Np, compute_dtype)

    compiler_params = pltpu.CompilerParams(
        dimension_semantics=("parallel", "arbitrary"),
        vmem_limit_bytes=budget,
    )

    if reassociate:
        # xw = x @ W is a small one-off matmul; let XLA do it, then stream it.
        xw = jnp.dot(x.astype(jnp.float32), w.astype(jnp.float32))
        xw_p = _prep(xw, Np, Vp, compute_dtype)
        cost = pl.CostEstimate(
            flops=2 * Bp * Np * Vp,
            transcendentals=0,
            bytes_accessed=(sgs_p.size + xw_p.size) * bytes_per
            + Bp * Vp * out_itemsize,
        )
        y_p = pl.pallas_call(
            _sgs_accum_kernel,
            out_shape=jax.ShapeDtypeStruct((Bp, Vp), out_dtype),
            grid_spec=pltpu.PrefetchScalarGridSpec(
                num_scalar_prefetch=0,
                grid=grid,
                in_specs=[
                    pl.BlockSpec((tb, tn), lambda i, n: (i, n)),   # sgs tile
                    pl.BlockSpec((tn, Vp), lambda i, n: (n, 0)),   # xw tile
                ],
                out_specs=pl.BlockSpec((tb, Vp), lambda i, n: (i, 0)),
                scratch_shapes=[pltpu.VMEM((tb, Vp), jnp.float32)],
            ),
            compiler_params=compiler_params,
            cost_estimate=cost,
        )(sgs_p, xw_p)
    else:
        x_p = _prep(x, Np, Mp, compute_dtype)
        w_p = _prep(w, Mp, Vp, jnp.float32)    # finalize matmul stays f32
        cost = pl.CostEstimate(
            flops=2 * Bp * Np * Mp + 2 * Bp * Mp * Vp,
            transcendentals=0,
            bytes_accessed=(sgs_p.size + x_p.size) * bytes_per
            + w_p.size * 4 + Bp * Vp * out_itemsize,
        )

        def _call(single_buffer_w):
            if single_buffer_w:
                # W is constant across the grid -> single-buffer it to halve
                # its VMEM footprint (matters most on v7x's 64 MiB VMEM).
                w_spec = pl.BlockSpec((Mp, Vp), lambda i, n: (0, 0),
                                      pipeline_mode=pl.Buffered(1))
            else:
                w_spec = pl.BlockSpec((Mp, Vp), lambda i, n: (0, 0))
            return pl.pallas_call(
                _sgs_accum_w_kernel,
                out_shape=jax.ShapeDtypeStruct((Bp, Vp), out_dtype),
                grid_spec=pltpu.PrefetchScalarGridSpec(
                    num_scalar_prefetch=0,
                    grid=grid,
                    in_specs=[
                        pl.BlockSpec((tb, tn), lambda i, n: (i, n)),   # sgs
                        pl.BlockSpec((tn, Mp), lambda i, n: (n, 0)),   # x
                        w_spec,                                        # W
                    ],
                    out_specs=pl.BlockSpec((tb, Vp), lambda i, n: (i, 0)),
                    scratch_shapes=[pltpu.VMEM((tb, Mp), jnp.float32)],
                ),
                compiler_params=compiler_params,
                cost_estimate=cost,
            )(sgs_p, x_p, w_p)

        try:
            y_p = _call(True)
        except Exception:
            # Fallback if this jax build rejects single-buffered block specs.
            y_p = _call(False)

    if Bp != B or Vp != V:
        y_p = y_p[:B, :V]
    return y_p


def _reference(x, sgs, w):
    x64 = np.asarray(x, np.float64)
    sgs64 = np.asarray(sgs, np.float64)
    w64 = np.asarray(w, np.float64)
    return (sgs64 @ x64) @ w64


if __name__ == "__main__":
    key = jax.random.PRNGKey(0)

    # ---- small shapes (re-associated path: vdim <= mdim) ----
    N, mdim, vdim, B = 16, 32, 32, 8
    k1, k2, k3 = jax.random.split(key, 3)
    x = jax.random.normal(k1, (N, mdim), dtype=jnp.float32)
    sgs = (jax.random.uniform(k2, (B, N)) > 0.5).astype(jnp.float32)
    bound = math.sqrt(6.0 / (mdim + vdim))        # xavier_uniform_
    w = jax.random.uniform(k3, (mdim, vdim), minval=-bound, maxval=bound,
                           dtype=jnp.float32)
    y_ref = _reference(x, sgs, w)

    y = hgnn_sg_attn_multiplicative(x, sgs, w, use_bf16=False)
    jax.block_until_ready(y)
    np.testing.assert_allclose(np.asarray(y), y_ref, rtol=1e-4, atol=1e-4)

    y_bf16 = hgnn_sg_attn_multiplicative(x, sgs, w)          # default bf16 path
    jax.block_until_ready(y_bf16)
    np.testing.assert_allclose(np.asarray(y_bf16), y_ref, rtol=3e-2, atol=5e-2)

    # ---- larger shapes: B-parallel grid (2 tiles) + N reduction ----
    B2, N2, M2, V2 = 256, 1024, 256, 128
    k4, k5, k6 = jax.random.split(jax.random.PRNGKey(1), 3)
    x2 = jax.random.normal(k4, (N2, M2), dtype=jnp.float32)
    sgs2 = (jax.random.uniform(k5, (B2, N2)) > 0.5).astype(jnp.float32)
    w2 = jax.random.uniform(k6, (M2, V2), minval=-0.05, maxval=0.05,
                            dtype=jnp.float32)
    y2_ref = _reference(x2, sgs2, w2)

    y2 = hgnn_sg_attn_multiplicative(x2, sgs2, w2, use_bf16=False)
    jax.block_until_ready(y2)
    np.testing.assert_allclose(np.asarray(y2), y2_ref, rtol=1e-3, atol=1e-2)

    y2_bf16 = hgnn_sg_attn_multiplicative(x2, sgs2, w2)
    jax.block_until_ready(y2_bf16)
    np.testing.assert_allclose(np.asarray(y2_bf16), y2_ref, rtol=2e-2, atol=5e-1)

    # ---- vdim > mdim: resident-W path with in-kernel f32 finalize matmul ----
    B3, N3, M3, V3 = 64, 384, 128, 256
    k7, k8, k9 = jax.random.split(jax.random.PRNGKey(2), 3)
    x3 = jax.random.normal(k7, (N3, M3), dtype=jnp.float32)
    sgs3 = (jax.random.uniform(k8, (B3, N3)) > 0.5).astype(jnp.float32)
    w3 = jax.random.uniform(k9, (M3, V3), minval=-0.05, maxval=0.05,
                            dtype=jnp.float32)
    y3_ref = _reference(x3, sgs3, w3)

    y3 = hgnn_sg_attn_multiplicative(x3, sgs3, w3, use_bf16=False)
    jax.block_until_ready(y3)
    np.testing.assert_allclose(np.asarray(y3), y3_ref, rtol=1e-4, atol=1e-3)

    y3_bf16 = hgnn_sg_attn_multiplicative(x3, sgs3, w3)
    jax.block_until_ready(y3_bf16)
    np.testing.assert_allclose(np.asarray(y3_bf16), y3_ref, rtol=2e-2, atol=2e-1)

    print("KERNEL_OK")
</pallas_src>

<mosaic_0001>
module attributes {stable_mosaic.version = 11 : i64} {
  func.func @_sgs_accum_kernel(%arg0: i32, %arg1: i32, %arg2: memref<8x128xf32, #tpu.memory_space<vmem>>, %arg3: memref<128x128xf32, #tpu.memory_space<vmem>>, %arg4: memref<8x128xf32, #tpu.memory_space<vmem>>, %arg5: memref<8x128xf32, #tpu.memory_space<vmem>>) attributes {dimension_semantics = [#tpu.dimension_semantics<parallel>, #tpu.dimension_semantics<arbitrary>], iteration_bounds = array<i64: 1, 1>, scalar_prefetch = 0 : i64, scratch_operands = 1 : i64, tpu.core_type = #tpu.core_type<tc>, window_params = [{transform_indices = @transform_0, window_bounds = array<i64: 8, 128>}, {transform_indices = @transform_1, window_bounds = array<i64: 128, 128>}, {transform_indices = @transform_2, window_bounds = array<i64: 8, 128>}]} {
    %c0 = arith.constant 0 : index
    %c0_0 = arith.constant 0 : index
    %0 = vector.load %arg2[%c0, %c0_0] : memref<8x128xf32, #tpu.memory_space<vmem>>, vector<8x128xf32>
    %c0_1 = arith.constant 0 : index
    %c0_2 = arith.constant 0 : index
    %1 = vector.load %arg3[%c0_1, %c0_2] : memref<128x128xf32, #tpu.memory_space<vmem>>, vector<128x128xf32>
    %cst = arith.constant dense<0.000000e+00> : vector<8x128xf32>
    %2 = tpu.matmul %0, %1, %cst {dimension_numbers = #tpu.dot_dimension_numbers<[1], [0], [0], [1], [0, 0, 1, 1], [], []>} : vector<8x128xf32>, vector<128x128xf32>, vector<8x128xf32> -> vector<8x128xf32>
    %c0_i32 = arith.constant 0 : i32
    %3 = arith.cmpi eq, %arg1, %c0_i32 : i32
    %4 = arith.extui %3 : i1 to i32
    %c0_i32_3 = arith.constant 0 : i32
    %5 = arith.cmpi ne, %4, %c0_i32_3 : i32
    scf.if %5 {
      %c0_8 = arith.constant 0 : index
      %c0_9 = arith.constant 0 : index
      %12 = vector.load %arg5[%c0_8, %c0_9] : memref<8x128xf32, #tpu.memory_space<vmem>>, vector<8x128xf32>
      tpu.vector_store %arg5[%c0_8, %c0_9], %2 {strides = array<i32>} : memref<8x128xf32, #tpu.memory_space<vmem>>, vector<8x128xf32>,
    } else {
    }
    %c0_i32_4 = arith.constant 0 : i32
    %6 = arith.cmpi ne, %arg1, %c0_i32_4 : i32
    %7 = arith.extui %6 : i1 to i32
    %c0_i32_5 = arith.constant 0 : i32
    %8 = arith.cmpi ne, %7, %c0_i32_5 : i32
    scf.if %8 {
      %c0_8 = arith.constant 0 : index
      %c0_9 = arith.constant 0 : index
      %12 = vector.load %arg5[%c0_8, %c0_9] : memref<8x128xf32, #tpu.memory_space<vmem>>, vector<8x128xf32>
      %13 = arith.addf %12, %2 : vector<8x128xf32>
      %c0_10 = arith.constant 0 : index
      %c0_11 = arith.constant 0 : index
      %14 = vector.load %arg5[%c0_10, %c0_11] : memref<8x128xf32, #tpu.memory_space<vmem>>, vector<8x128xf32>
      tpu.vector_store %arg5[%c0_10, %c0_11], %13 {strides = array<i32>} : memref<8x128xf32, #tpu.memory_space<vmem>>, vector<8x128xf32>,
    } else {
    }
    %c0_i32_6 = arith.constant 0 : i32
    %9 = arith.cmpi eq, %arg1, %c0_i32_6 : i32
    %10 = arith.extui %9 : i1 to i32
    %c0_i32_7 = arith.constant 0 : i32
    %11 = arith.cmpi ne, %10, %c0_i32_7 : i32
    scf.if %11 {
      %c0_8 = arith.constant 0 : index
      %c0_9 = arith.constant 0 : index
      %12 = vector.load %arg5[%c0_8, %c0_9] : memref<8x128xf32, #tpu.memory_space<vmem>>, vector<8x128xf32>
      %c0_10 = arith.constant 0 : index
      %c0_11 = arith.constant 0 : index
      %13 = vector.load %arg4[%c0_10, %c0_11] : memref<8x128xf32, #tpu.memory_space<vmem>>, vector<8x128xf32>
      tpu.vector_store %arg4[%c0_10, %c0_11], %12 {strides = array<i32>} : memref<8x128xf32, #tpu.memory_space<vmem>>, vector<8x128xf32>,
    } else {
    }
    return
  }
  func.func @transform_0(%arg0: i32, %arg1: i32) -> (i32, i32) {
    %c0_i32 = arith.constant 0 : i32
    return %arg0, %arg1 : i32, i32
  }
  func.func @transform_1(%arg0: i32, %arg1: i32) -> (i32, i32) {
    %c0_i32 = arith.constant 0 : i32
    %c0_i32_0 = arith.constant 0 : i32
    return %arg1, %c0_i32 : i32, i32
  }
  func.func @transform_2(%arg0: i32, %arg1: i32) -> (i32, i32) {
    %c0_i32 = arith.constant 0 : i32
    %c0_i32_0 = arith.constant 0 : i32
    return %arg0, %c0_i32 : i32, i32
  }
}

</mosaic_0001>

<llo_original>
// kernel: tpu_custom_call.1
$region0: #{tpu_custom_call.1}
  #allocation0 [shape = 'u32[]', space=smem, size = 0x4, offset = 0x4, fixed_abs, tag = 'smem constant byte address 0x4 - core index']
  #allocation1 [shape = 'u32[144,128]{1,0:T(1,128)}', space=vmem, size = 0x12000, scoped, tag = 'internal scratch']
  #allocation2 [shape = 'f32[8,128]{1,0:T(8,128)}', space=vmem, size = 0x1000, scoped, tag = 'scratch operand']
  %s0 = inlined_call_operand.hbm [shape: f32[8,128], index: 0, kind: input, shape index: {}]
  %s1 = inlined_call_operand.hbm [shape: f32[128,128], index: 1, kind: input, shape index: {}]
  %s2 = inlined_call_operand.hbm [shape: f32[8,128], index: 2, kind: output, shape index: {}]
  %s3 = sld [smem:[#allocation0]]
  $region38: #{tpu_custom_call.1} parent=0
    _
  %s5 = ssub.s32 1, %s3
  %s6 = scalar_select 0, %s5, %s3
  $region1: #{tpu_custom_call.1} parent=0
    #allocation3 [shape = 'u8[4096]{0}', space=vmem, size = 0x1000, scoped, tag = 'input window, operand 0, single buffered']
    #allocation4 [shape = 's32[1]{0}', space=sflag, size = 0x4, scoped, tag = 'scoped memory for tpu_custom_call.1']
    #allocation5 [shape = 's32[1]{0}', space=sflag, size = 0x4, scoped, tag = 'scoped memory for tpu_custom_call.1']
    #allocation6 [shape = 'u8[65536]{0}', space=vmem, size = 0x10000, scoped, tag = 'input window, operand 1, single buffered']
    #allocation7 [shape = 's32[1]{0}', space=sflag, size = 0x4, scoped, tag = 'scoped memory for tpu_custom_call.1']
    #allocation8 [shape = 'u8[4096]{0}', space=vmem, size = 0x1000, scoped, tag = 'output window, operand 0, single buffered']
    %7 = vsyncpa [#allocation4], 0
    %8 = vsyncpa [#allocation7], 0
    %9 = vsyncpa [#allocation5], 0
    // Predicated region
    $region2: #{tpu_custom_call.1} parent=1 // pred_check
      _
    $region3: #{tpu_custom_call.1} parent=1 // pred_check_branch
      %11 = sbr.rel (0) target = $region5
    $region4: #{tpu_custom_call.1} parent=1 // pred_region
      %s13 = ssub.s32 128, 128
      %14 = vsyncadd [#allocation4], %s13
      %s16 = sshll.u32 [#allocation3], 4
      %s17 = int_to_ptr.vmem [resolvable:$true] %s16
      %19 = dma.hbm_to_vmem [thread:$0]  %s0, 128, %s17, [#allocation4]
    $region5: #{tpu_custom_call.1} parent=1 // pred_fallthru
      _
    // Predicated region
    $region6: #{tpu_custom_call.1} parent=1 // pred_check
      _
    $region7: #{tpu_custom_call.1} parent=1 // pred_check_branch
      %21 = sbr.rel (0) target = $region9
    $region8: #{tpu_custom_call.1} parent=1 // pred_region
      %s23 = ssub.s32 2048, 2048
      %24 = vsyncadd [#allocation7], %s23
      %s25 = sshll.u32 [#allocation6], 4
      %s26 = int_to_ptr.vmem [resolvable:$true] %s25
      %31 = dma.hbm_to_vmem [thread:$0]  %s1, 2048, %s26, [#allocation7], 128, 128, 8
    $region9: #{tpu_custom_call.1} parent=1 // pred_fallthru
      _
    // Predicated region
    $region10: #{tpu_custom_call.1} parent=1 // pred_check
      _
    $region11: #{tpu_custom_call.1} parent=1 // pred_check_branch
      %33 = sbr.rel (0) target = $region13
    $region12: #{tpu_custom_call.1} parent=1 // pred_region
      %34 = dma.done [#allocation4], 128
    $region13: #{tpu_custom_call.1} parent=1 // pred_fallthru
      _
    // Predicated region
    $region14: #{tpu_custom_call.1} parent=1 // pred_check
      _
    $region15: #{tpu_custom_call.1} parent=1 // pred_check_branch
      %36 = sbr.rel (0) target = $region17
    $region16: #{tpu_custom_call.1} parent=1 // pred_region
      %37 = dma.done [#allocation7], 2048
    $region17: #{tpu_custom_call.1} parent=1 // pred_fallthru
      _
    %v38 = vld [vmem:[#allocation3] sm:$0xff]
    %v39 = vld [vmem:[#allocation6] sm:$0xff]
    %v40 = vld [vmem:[#allocation6 + $0x8] sm:$0xff]
    %v41 = vld [vmem:[#allocation6 + $0x10] sm:$0xff]
    %v42 = vld [vmem:[#allocation6 + $0x18] sm:$0xff]
    %v43 = vld [vmem:[#allocation6 + $0x20] sm:$0xff]
    %v44 = vld [vmem:[#allocation6 + $0x28] sm:$0xff]
    %v45 = vld [vmem:[#allocation6 + $0x30] sm:$0xff]
    %v46 = vld [vmem:[#allocation6 + $0x38] sm:$0xff]
    %v47 = vld [vmem:[#allocation6 + $0x40] sm:$0xff]
    %v48 = vld [vmem:[#allocation6 + $0x48] sm:$0xff]
    %v49 = vld [vmem:[#allocation6 + $0x50] sm:$0xff]
    %v50 = vld [vmem:[#allocation6 + $0x58] sm:$0xff]
    %v51 = vld [vmem:[#allocation6 + $0x60] sm:$0xff]
    %v52 = vld [vmem:[#allocation6 + $0x68] sm:$0xff]
    %v53 = vld [vmem:[#allocation6 + $0x70] sm:$0xff]
    %v54 = vld [vmem:[#allocation6 + $0x78] sm:$0xff]
    %55 = vmatprep.subr.mxu0 0.0
    %56 = vmatpush1.msra.mxu0 %v54
    %57 = vmatprep.subr.mxu0 0.0
    %58 = vmatpush1.msra.mxu0 %v53
    %59 = vmatprep.subr.mxu0 0.0
    %60 = vmatpush1.msra.mxu0 %v52
    %61 = vmatprep.subr.mxu0 0.0
    %62 = vmatpush1.msra.mxu0 %v51
    %63 = vmatprep.subr.mxu0 0.0
    %64 = vmatpush1.msra.mxu0 %v50
    %65 = vmatprep.subr.mxu0 0.0
    %66 = vmatpush1.msra.mxu0 %v49
    %67 = vmatprep.subr.mxu0 0.0
    %68 = vmatpush1.msra.mxu0 %v48
    %69 = vmatprep.subr.mxu0 0.0
    %70 = vmatpush1.msra.mxu0 %v47
    %71 = vmatprep.subr.mxu0 0.0
    %72 = vmatpush1.msra.mxu0 %v46
    %73 = vmatprep.subr.mxu0 0.0
    %74 = vmatpush1.msra.mxu0 %v45
    %75 = vmatprep.subr.mxu0 0.0
    %76 = vmatpush1.msra.mxu0 %v44
    %77 = vmatprep.subr.mxu0 0.0
    %78 = vmatpush1.msra.mxu0 %v43
    %79 = vmatprep.subr.mxu0 0.0
    %80 = vmatpush1.msra.mxu0 %v42
    %81 = vmatprep.subr.mxu0 0.0
    %82 = vmatpush1.msra.mxu0 %v41
    %83 = vmatprep.subr.mxu0 0.0
    %84 = vmatpush1.msra.mxu0 %v40
    %85 = vmatprep.subr.mxu0 0.0
    %86 = vmatpush1.msra.mxu0 %v39
    %87 = vmatprep.subr.mxu0 0.0
    %88 = vmatpush2.msra.mxu0 0.0
    %89 = vmatprep.subr.mxu0 0.0
    %90 = vmatpush2.msra.mxu0 0.0
    %91 = vmatprep.subr.mxu0 0.0
    %92 = vmatpush2.msra.mxu0 0.0
    %93 = vmatprep.subr.mxu0 0.0
    %94 = vmatpush2.msra.mxu0 0.0
    %95 = vmatprep.subr.mxu0 0.0
    %96 = vmatpush2.msra.mxu0 0.0
    %97 = vmatprep.subr.mxu0 0.0
    %98 = vmatpush2.msra.mxu0 0.0
    %99 = vmatprep.subr.mxu0 0.0
    %100 = vmatpush2.msra.mxu0 0.0
    %101 = vmatprep.subr.mxu0 0.0
    %102 = vmatpush2.msra.mxu0 0.0
    %103 = vmatprep.subr.mxu0 0.0
    %104 = vmatpush2.msra.mxu0 0.0
    %105 = vmatprep.subr.mxu0 0.0
    %106 = vmatpush2.msra.mxu0 0.0
    %107 = vmatprep.subr.mxu0 0.0
    %108 = vmatpush2.msra.mxu0 0.0
    %109 = vmatprep.subr.mxu0 0.0
    %110 = vmatpush2.msra.mxu0 0.0
    %111 = vmatprep.subr.mxu0 0.0
    %112 = vmatpush2.msra.mxu0 0.0
    %113 = vmatprep.subr.mxu0 0.0
    %114 = vmatpush2.msra.mxu0 0.0
    %115 = vmatprep.subr.mxu0 0.0
    %116 = vmatpush2.msra.mxu0 0.0
    %117 = vmatprep.subr.mxu0 0.0
    %118 = vmatpush2.msra.mxu0 0.0
    %119 = vmatprep.mubr.f32.mxu0 0.0
    %120 = vmatmul.mubr.f32.gmra.mxu0 %v38
    %v121 = vpop.f32.mrf.mxu0
    %v122 = vadd.f32 0.0, %v121
    %v123 = vpop.f32.mrf.mxu0
    %124 = vdwg.mxu0
    %p125 = scmp.eq.s32.totalorder 0, 0
    // Predicated region
    $region18: #{tpu_custom_call.1} parent=1 // pred_check
      %p126 = pneg %p125
    $region19: #{tpu_custom_call.1} parent=1 // pred_check_branch
      %128 = sbr.rel (%p126) target = $region21
    $region20: #{tpu_custom_call.1} parent=1 // pred_region
      %129 = vst [vmem:[#allocation2] sm:$0xff] %v122
    $region21: #{tpu_custom_call.1} parent=1 // pred_fallthru
      _
    %p130 = scmp.ne.s32.totalorder 0, 0
    // Predicated region
    $region22: #{tpu_custom_call.1} parent=1 // pred_check
      %p131 = pneg %p130
    $region23: #{tpu_custom_call.1} parent=1 // pred_check_branch
      %133 = sbr.rel (%p131) target = $region25
    $region24: #{tpu_custom_call.1} parent=1 // pred_region
      %v134 = vld [vmem:[#allocation2] sm:$0xff]
      %v135 = vadd.f32 %v134, %v122
      %136 = vst [vmem:[#allocation2] sm:$0xff] %v135
    $region25: #{tpu_custom_call.1} parent=1 // pred_fallthru
      _
    // Predicated region
    $region26: #{tpu_custom_call.1} parent=1 // pred_check
      %p137 = pneg %p125
    $region27: #{tpu_custom_call.1} parent=1 // pred_check_branch
      %139 = sbr.rel (%p137) target = $region29
    $region28: #{tpu_custom_call.1} parent=1 // pred_region
      %v140 = vld [vmem:[#allocation2] sm:$0xff]
      %141 = vst [vmem:[#allocation8] sm:$0xff] %v140
    $region29: #{tpu_custom_call.1} parent=1 // pred_fallthru
      _
    // Predicated region
    $region30: #{tpu_custom_call.1} parent=1 // pred_check
      _
    $region31: #{tpu_custom_call.1} parent=1 // pred_check_branch
      %143 = sbr.rel (0) target = $region33
    $region32: #{tpu_custom_call.1} parent=1 // pred_region
      %s145 = ssub.s32 128, 128
      %146 = vsyncadd [#allocation5], %s145
      %s148 = sshll.u32 [#allocation8], 4
      %s149 = int_to_ptr.vmem [resolvable:$true] %s148
      %151 = dma.vmem_to_hbm [thread:$0]  %s149, 128, %s2, [#allocation5]
    $region33: #{tpu_custom_call.1} parent=1 // pred_fallthru
      _
    // Predicated region
    $region34: #{tpu_custom_call.1} parent=1 // pred_check
      _
    $region35: #{tpu_custom_call.1} parent=1 // pred_check_branch
      %153 = sbr.rel (0) target = $region37
    $region36: #{tpu_custom_call.1} parent=1 // pred_region
      %154 = dma.done [#allocation5], 128
    $region37: #{tpu_custom_call.1} parent=1 // pred_fallthru
      _
    %155 = vsyncpa [#allocation4], 1
    %156 = vsyncpa [#allocation7], 1
    %157 = vsyncpa [#allocation5], 1

</llo_original>
